<compile_context>
chip_gen: v7x
topology: tpu7x:2x2x1
jax: 0.10.0
libtpu: 0.0.40
codegen_flags: <defaults>
</compile_context>

<pallas_src>
import functools

import numpy as np
import jax
import jax.numpy as jnp
from jax.experimental import pallas as pl
from jax.experimental.pallas import tpu as pltpu


def _attention_kernel(enc_ref, att2_ref, we_ref, wf_ref, awe_ref, alpha_ref, *,
                      num_pixels):
    # enc_ref:   (TB, P8, E)  encoder_out tile, compute dtype (bf16 or f32)
    # att2_ref:  (TB, A)      decoder projection + both linear biases, f32
    # we_ref:    (E, A)       encoder_att weight, compute dtype (grid-invariant)
    # wf_ref:    (1, A)       full_att weight as a row (VPU use), f32
    # awe_ref:   (TB, E)      attention-weighted encoding output, f32
    # alpha_ref: (TB, P8)     softmax weights output (pixel axis on lanes), f32
    TB, P8, E = enc_ref.shape
    A = we_ref.shape[1]

    enc = enc_ref[...]                                        # (TB, P8, E)

    # att1 = encoder_att(encoder_out): one big MXU matmul with M = TB*P8.
    # P8 % 8 == 0, so the reshape merges sublane-major dims without a relayout.
    att1 = jnp.dot(enc.reshape(TB * P8, E), we_ref[...],
                   preferred_element_type=jnp.float32)        # (TB*P8, A) f32
    att1 = att1.reshape(TB, P8, A)

    # relu(att1 + att2.unsqueeze(1))   (both biases already folded into att2)
    h = jnp.maximum(att1 + att2_ref[...][:, None, :], 0.0)    # (TB, P8, A) f32

    # full_att: degenerate N=1 matmul -> VPU multiply + lane reduce.
    # The full_att scalar bias is omitted (softmax is shift-invariant).
    att = jnp.sum(h * wf_ref[...], axis=-1)                   # (TB, P8) f32

    if num_pixels != P8:
        # Padded pixels -> -inf -> exactly zero softmax weight.
        pix = jax.lax.broadcasted_iota(jnp.int32, att.shape, 1)
        att = jnp.where(pix < num_pixels, att, -jnp.inf)

    # softmax over the (lane-dense) pixel axis
    m = jnp.max(att, axis=-1, keepdims=True)                  # (TB, 1)
    e = jnp.exp(att - m)                                      # (TB, P8)
    denom = jnp.sum(e, axis=-1, keepdims=True)                # (TB, 1)
    approx = bool(enc_ref.dtype != jnp.float32)               # exact recip on the f32 path
    alpha = e * pl.reciprocal(denom, approx=approx)           # (TB, P8)

    # attention_weighted_encoding: multiply in the compute dtype, accumulate the
    # pixel-axis (sublane) reduction in f32.
    prod = enc * alpha[:, :, None].astype(enc.dtype)          # (TB, P8, E)
    awe = jnp.sum(prod, axis=1, dtype=jnp.float32)            # (TB, E) f32

    awe_ref[...] = awe.astype(awe_ref.dtype)
    alpha_ref[...] = alpha.astype(alpha_ref.dtype)


def attention_forward(encoder_out, decoder_hidden, params, *,
                      compute_dtype=jnp.bfloat16,
                      batch_tile=None,
                      vmem_limit_bytes=48 * 1024 * 1024):
    """encoder_out: (B, P, E); decoder_hidden: (B, D). Returns (awe, alpha)."""
    B, P, E = encoder_out.shape
    A = params["we"].shape[1]
    cbytes = np.dtype(compute_dtype).itemsize

    # ---- pixel axis padded to a multiple of 8 (sublane alignment; keeps the
    # in-kernel reshape layout-free). Padded pixels are masked in the kernel.
    P8 = ((P + 7) // 8) * 8
    if P8 != P:
        encoder_out = jnp.pad(encoder_out, ((0, 0), (0, P8 - P), (0, 0)))

    # ---- batch tile: multiple of 8 rows (or the whole small batch), sized from
    # a VMEM budget, capped so the "parallel" batch axis keeps >= 2 grid steps
    # when B allows (both v7x TensorCores get work).
    if B <= 8:
        TB = B
    elif batch_tile is not None:
        TB = max(8, (min(batch_tile, B) // 8) * 8)
    else:
        per_row = (2 * P8 * E * cbytes        # encoder tile (double-buffered)
                   + 2 * P8 * A * 4           # att1 / h f32 intermediates
                   + 2 * (E + P8) * 4         # awe + alpha output blocks
                   + 2 * A * 4)               # att2 rows
        resident = 2 * E * A * cbytes + A * 4 + (2 << 20)     # we (+wf) + slack
        tb_fit = max(8, int((vmem_limit_bytes - resident) // per_row) // 8 * 8)
        tb_half = max(8, ((-(-B // 2)) + 7) // 8 * 8)         # ceil(B/2) -> mult of 8
        TB = min(tb_fit, tb_half, 256)
    n_tiles = -(-B // TB)
    B_pad = n_tiles * TB
    if B_pad != B:
        encoder_out = jnp.pad(encoder_out, ((0, B_pad - B), (0, 0), (0, 0)))
        decoder_hidden = jnp.pad(decoder_hidden, ((0, B_pad - B), (0, 0)))

    # ---- hoisted decoder projection (tiny (B, A) matmul), both biases folded,
    # kept in f32.
    att2 = (decoder_hidden.astype(jnp.float32) @ params["wd"].astype(jnp.float32)
            + params["bd"].reshape(1, A) + params["be"].reshape(1, A)
            ).astype(jnp.float32)

    # MXU operands in the compute dtype (bf16 by default); everything else f32.
    enc = encoder_out.astype(compute_dtype)                   # (B_pad, P8, E)
    we = params["we"].astype(compute_dtype)                   # (E, A)
    wf = params["wf"].reshape(1, A).astype(jnp.float32)       # row layout for VPU
    # params["bf"] intentionally unused (softmax shift-invariance).

    out_shapes = (
        jax.ShapeDtypeStruct((B_pad, E), jnp.float32),        # awe
        jax.ShapeDtypeStruct((B_pad, P8), jnp.float32),       # alpha (padded pixels)
    )
    out_specs = [
        pl.BlockSpec((TB, E), lambda b: (b, 0)),
        pl.BlockSpec((TB, P8), lambda b: (b, 0)),
    ]

    flops = 2 * B_pad * P8 * E * A + 4 * B_pad * P8 * A + 2 * B_pad * P8 * E
    bytes_accessed = (B_pad * P8 * E * cbytes + B_pad * A * 4 + E * A * cbytes
                      + A * 4 + B_pad * E * 4 + B_pad * P8 * 4)
    cost = pl.CostEstimate(flops=flops, transcendentals=B_pad * P8,
                           bytes_accessed=bytes_accessed)

    kernel = functools.partial(_attention_kernel, num_pixels=P)

    def _run(single_buffer_weights):
        # Grid-invariant operands (we, wf) only need a single VMEM buffer.
        wkw = ({"pipeline_mode": pl.Buffered(buffer_count=1)}
               if single_buffer_weights else {})
        in_specs = [
            pl.BlockSpec((TB, P8, E), lambda b: (b, 0, 0)),   # encoder tile
            pl.BlockSpec((TB, A), lambda b: (b, 0)),          # att2 rows
            pl.BlockSpec((E, A), lambda b: (0, 0), **wkw),    # we (resident)
            pl.BlockSpec((1, A), lambda b: (0, 0), **wkw),    # wf row (resident)
        ]
        grid_spec = pltpu.PrefetchScalarGridSpec(
            num_scalar_prefetch=0,
            grid=(n_tiles,),
            in_specs=in_specs,
            out_specs=out_specs,
        )
        return pl.pallas_call(
            kernel,
            out_shape=out_shapes,
            grid_spec=grid_spec,
            compiler_params=pltpu.CompilerParams(
                dimension_semantics=("parallel",),   # batch axis shards across v7x TCs
                vmem_limit_bytes=vmem_limit_bytes),
            cost_estimate=cost,
        )(enc, att2, we, wf)

    try:
        awe, alpha = _run(True)
    except Exception:
        # Fallback if this Pallas build rejects pipeline_mode=Buffered(1).
        awe, alpha = _run(False)

    return awe[:B], alpha[:B, :P]


def init_params(key, encoder_dim, decoder_dim, attention_dim):
    """Deterministic init mimicking PyTorch nn.Linear default (uniform +-1/sqrt(fan_in))."""
    ks = jax.random.split(key, 6)

    def lin(kw, kb, fan_in, fan_out):
        bound = 1.0 / jnp.sqrt(fan_in)
        w = jax.random.uniform(kw, (fan_in, fan_out), jnp.float32, -bound, bound)
        b = jax.random.uniform(kb, (fan_out,), jnp.float32, -bound, bound)
        return w, b

    we, be = lin(ks[0], ks[1], encoder_dim, attention_dim)
    wd, bd = lin(ks[2], ks[3], decoder_dim, attention_dim)
    wf, bf = lin(ks[4], ks[5], attention_dim, 1)
    return {"we": we, "be": be, "wd": wd, "bd": bd, "wf": wf, "bf": bf}


def reference_forward(encoder_out, decoder_hidden, p):
    """Pure-JAX reference matching the PyTorch semantics."""
    att1 = encoder_out @ p["we"] + p["be"]                       # (B, P, A)
    att2 = decoder_hidden @ p["wd"] + p["bd"]                    # (B, A)
    h = jnp.maximum(att1 + att2[:, None, :], 0.0)                # (B, P, A)
    att = (h @ p["wf"]).squeeze(-1) + p["bf"]                    # (B, P)
    alpha = jax.nn.softmax(att, axis=1)                          # (B, P)
    awe = jnp.sum(encoder_out * alpha[:, :, None], axis=1)       # (B, E)
    return awe, alpha


if __name__ == "__main__":
    # num_pixels deliberately NOT a multiple of 8 to exercise the pad+mask path.
    B, P = 2, 14
    encoder_dim = 32
    decoder_dim = 32
    attention_dim = 32

    key = jax.random.PRNGKey(0)
    k_enc, k_dec, k_params = jax.random.split(key, 3)

    encoder_out = jax.random.normal(k_enc, (B, P, encoder_dim), jnp.float32)
    decoder_hidden = jax.random.normal(k_dec, (B, decoder_dim), jnp.float32)
    params = init_params(k_params, encoder_dim, decoder_dim, attention_dim)

    awe_ref, alpha_ref = reference_forward(encoder_out, decoder_hidden, params)

    # f32 path: tight check against the pure-JAX reference.
    awe32, alpha32 = attention_forward(encoder_out, decoder_hidden, params,
                                       compute_dtype=jnp.float32)
    jax.block_until_ready((awe32, alpha32))
    assert jnp.allclose(awe32, awe_ref, atol=1e-4, rtol=1e-4), "awe mismatch (f32)"
    assert jnp.allclose(alpha32, alpha_ref, atol=1e-4, rtol=1e-4), "alpha mismatch (f32)"

    # Default bf16 MXU path: looser tolerance (operands quantized to bf16).
    awe16, alpha16 = attention_forward(encoder_out, decoder_hidden, params)
    jax.block_until_ready((awe16, alpha16))
    assert jnp.allclose(awe16, awe_ref, atol=1e-1, rtol=1e-1), "awe mismatch (bf16)"
    assert jnp.allclose(alpha16, alpha_ref, atol=5e-2, rtol=5e-2), "alpha mismatch (bf16)"

    print("KERNEL_OK")
</pallas_src>

<mosaic_0001>
module attributes {stable_mosaic.version = 11 : i64} {
  func.func @_attention_kernel(%arg0: i32, %arg1: memref<2x16x32xf32, #tpu.memory_space<vmem>>, %arg2: memref<2x32xf32, #tpu.memory_space<vmem>>, %arg3: memref<32x32xf32, #tpu.memory_space<vmem>>, %arg4: memref<1x32xf32, #tpu.memory_space<vmem>>, %arg5: memref<2x32xf32, #tpu.memory_space<vmem>>, %arg6: memref<2x16xf32, #tpu.memory_space<vmem>>) attributes {dimension_semantics = [#tpu.dimension_semantics<parallel>], iteration_bounds = array<i64: 1>, scalar_prefetch = 0 : i64, scratch_operands = 0 : i64, tpu.core_type = #tpu.core_type<tc>, window_params = [{transform_indices = @transform_0, window_bounds = array<i64: 2, 16, 32>}, {transform_indices = @transform_1, window_bounds = array<i64: 2, 32>}, {pipeline_mode = #tpu.pipeline_mode<synchronous>, transform_indices = @transform_2, window_bounds = array<i64: 32, 32>}, {pipeline_mode = #tpu.pipeline_mode<synchronous>, transform_indices = @transform_3, window_bounds = array<i64: 1, 32>}, {transform_indices = @transform_4, window_bounds = array<i64: 2, 32>}, {transform_indices = @transform_5, window_bounds = array<i64: 2, 16>}]} {
    %c0 = arith.constant 0 : index
    %c0_0 = arith.constant 0 : index
    %c0_1 = arith.constant 0 : index
    %0 = vector.load %arg1[%c0, %c0_0, %c0_1] : memref<2x16x32xf32, #tpu.memory_space<vmem>>, vector<2x16x32xf32>
    %1 = vector.shape_cast %0 : vector<2x16x32xf32> to vector<32x32xf32>
    %c0_2 = arith.constant 0 : index
    %c0_3 = arith.constant 0 : index
    %2 = vector.load %arg3[%c0_2, %c0_3] : memref<32x32xf32, #tpu.memory_space<vmem>>, vector<32x32xf32>
    %cst = arith.constant dense<0.000000e+00> : vector<32x32xf32>
    %3 = tpu.matmul %1, %2, %cst {dimension_numbers = #tpu.dot_dimension_numbers<[1], [0], [0], [1], [0, 0, 1, 1], [], []>} : vector<32x32xf32>, vector<32x32xf32>, vector<32x32xf32> -> vector<32x32xf32>
    %4 = vector.shape_cast %3 : vector<32x32xf32> to vector<2x16x32xf32>
    %c0_4 = arith.constant 0 : index
    %c0_5 = arith.constant 0 : index
    %5 = vector.load %arg2[%c0_4, %c0_5] : memref<2x32xf32, #tpu.memory_space<vmem>>, vector<2x32xf32>
    %6 = vector.shape_cast %5 : vector<2x32xf32> to vector<2x1x32xf32>
    %7 = vector.broadcast %6 : vector<2x1x32xf32> to vector<2x16x32xf32>
    %8 = arith.addf %4, %7 : vector<2x16x32xf32>
    %cst_6 = arith.constant 0.000000e+00 : f32
    %9 = vector.broadcast %cst_6 : f32 to vector<2x16x32xf32>
    %10 = arith.maximumf %8, %9 : vector<2x16x32xf32>
    %c0_7 = arith.constant 0 : index
    %c0_8 = arith.constant 0 : index
    %11 = vector.load %arg4[%c0_7, %c0_8] : memref<1x32xf32, #tpu.memory_space<vmem>>, vector<1x32xf32>
    %12 = vector.shape_cast %11 : vector<1x32xf32> to vector<1x1x32xf32>
    %13 = vector.broadcast %12 : vector<1x1x32xf32> to vector<2x16x32xf32>
    %14 = arith.mulf %10, %13 : vector<2x16x32xf32>
    %cst_9 = arith.constant dense<0.000000e+00> : vector<2x16xf32>
    %15 = vector.multi_reduction <add>, %14, %cst_9 [2] : vector<2x16x32xf32> to vector<2x16xf32>
    %16 = tpu.iota {dimensions = array<i32: 1>} : vector<2x16xi32>
    %c14_i32 = arith.constant 14 : i32
    %17 = vector.broadcast %c14_i32 : i32 to vector<2x16xi32>
    %18 = arith.cmpi slt, %16, %17 : vector<2x16xi32>
    %cst_10 = arith.constant 0xFF800000 : f32
    %19 = vector.broadcast %cst_10 : f32 to vector<2x16xf32>
    %20 = arith.select %18, %15, %19 : vector<2x16xi1>, vector<2x16xf32>
    %cst_11 = arith.constant dense<0xFF800000> : vector<2xf32>
    %21 = vector.multi_reduction <maximumf>, %20, %cst_11 [1] : vector<2x16xf32> to vector<2xf32>
    %22 = vector.shape_cast %21 : vector<2xf32> to vector<2x1xf32>
    %23 = vector.broadcast %22 : vector<2x1xf32> to vector<2x16xf32>
    %24 = arith.subf %20, %23 : vector<2x16xf32>
    %25 = math.exp %24 : vector<2x16xf32>
    %cst_12 = arith.constant dense<0.000000e+00> : vector<2xf32>
    %26 = vector.multi_reduction <add>, %25, %cst_12 [1] : vector<2x16xf32> to vector<2xf32>
    %27 = vector.shape_cast %26 : vector<2xf32> to vector<2x1xf32>
    %28 = tpu.reciprocal %27 : vector<2x1xf32> -> vector<2x1xf32>
    %29 = vector.broadcast %28 : vector<2x1xf32> to vector<2x16xf32>
    %30 = arith.mulf %25, %29 : vector<2x16xf32>
    %31 = vector.shape_cast %30 : vector<2x16xf32> to vector<2x16x1xf32>
    %32 = vector.broadcast %31 : vector<2x16x1xf32> to vector<2x16x32xf32>
    %33 = arith.mulf %0, %32 : vector<2x16x32xf32>
    %cst_13 = arith.constant dense<0.000000e+00> : vector<2x32xf32>
    %34 = vector.multi_reduction <add>, %33, %cst_13 [1] : vector<2x16x32xf32> to vector<2x32xf32>
    %c0_14 = arith.constant 0 : index
    %c0_15 = arith.constant 0 : index
    %35 = vector.load %arg5[%c0_14, %c0_15] : memref<2x32xf32, #tpu.memory_space<vmem>>, vector<2x32xf32>
    tpu.vector_store %arg5[%c0_14, %c0_15], %34 {strides = array<i32>} : memref<2x32xf32, #tpu.memory_space<vmem>>, vector<2x32xf32>,
    %c0_16 = arith.constant 0 : index
    %c0_17 = arith.constant 0 : index
    %36 = vector.load %arg6[%c0_16, %c0_17] : memref<2x16xf32, #tpu.memory_space<vmem>>, vector<2x16xf32>
    tpu.vector_store %arg6[%c0_16, %c0_17], %30 {strides = array<i32>} : memref<2x16xf32, #tpu.memory_space<vmem>>, vector<2x16xf32>,
    return
  }
  func.func @transform_0(%arg0: i32) -> (i32, i32, i32) {
    %c0_i32 = arith.constant 0 : i32
    %c0_i32_0 = arith.constant 0 : i32
    %c0_i32_1 = arith.constant 0 : i32
    return %arg0, %c0_i32, %c0_i32_0 : i32, i32, i32
  }
  func.func @transform_1(%arg0: i32) -> (i32, i32) {
    %c0_i32 = arith.constant 0 : i32
    %c0_i32_0 = arith.constant 0 : i32
    return %arg0, %c0_i32 : i32, i32
  }
  func.func @transform_2(%arg0: i32) -> (i32, i32) {
    %c0_i32 = arith.constant 0 : i32
    %c0_i32_0 = arith.constant 0 : i32
    %c0_i32_1 = arith.constant 0 : i32
    return %c0_i32, %c0_i32_0 : i32, i32
  }
  func.func @transform_3(%arg0: i32) -> (i32, i32) {
    %c0_i32 = arith.constant 0 : i32
    %c0_i32_0 = arith.constant 0 : i32
    %c0_i32_1 = arith.constant 0 : i32
    return %c0_i32, %c0_i32_0 : i32, i32
  }
  func.func @transform_4(%arg0: i32) -> (i32, i32) {
    %c0_i32 = arith.constant 0 : i32
    %c0_i32_0 = arith.constant 0 : i32
    return %arg0, %c0_i32 : i32, i32
  }
  func.func @transform_5(%arg0: i32) -> (i32, i32) {
    %c0_i32 = arith.constant 0 : i32
    %c0_i32_0 = arith.constant 0 : i32
    return %arg0, %c0_i32 : i32, i32
  }
}

module attributes {stable_mosaic.version = 11 : i64} {
  func.func @_attention_kernel(%arg0: i32, %arg1: memref<2x16x32xf32, #tpu.memory_space<vmem>>, %arg2: memref<2x32xf32, #tpu.memory_space<vmem>>, %arg3: memref<32x32xf32, #tpu.memory_space<vmem>>, %arg4: memref<1x32xf32, #tpu.memory_space<vmem>>, %arg5: memref<2x32xf32, #tpu.memory_space<vmem>>, %arg6: memref<2x16xf32, #tpu.memory_space<vmem>>) attributes {dimension_semantics = [#tpu.dimension_semantics<parallel>], iteration_bounds = array<i64: 1>, scalar_prefetch = 0 : i64, scratch_operands = 0 : i64, tpu.core_type = #tpu.core_type<tc>, window_params = [{transform_indices = @transform_0, window_bounds = array<i64: 2, 16, 32>}, {transform_indices = @transform_1, window_bounds = array<i64: 2, 32>}, {pipeline_mode = #tpu.pipeline_mode<synchronous>, transform_indices = @transform_2, window_bounds = array<i64: 32, 32>}, {pipeline_mode = #tpu.pipeline_mode<synchronous>, transform_indices = @transform_3, window_bounds = array<i64: 1, 32>}, {transform_indices = @transform_4, window_bounds = array<i64: 2, 32>}, {transform_indices = @transform_5, window_bounds = array<i64: 2, 16>}]} {
    %c0 = arith.constant 0 : index
    %c0_0 = arith.constant 0 : index
    %c0_1 = arith.constant 0 : index
    %0 = vector.load %arg1[%c0, %c0_0, %c0_1] : memref<2x16x32xf32, #tpu.memory_space<vmem>>, vector<2x16x32xf32>
    %1 = vector.shape_cast %0 : vector<2x16x32xf32> to vector<32x32xf32>
    %c0_2 = arith.constant 0 : index
    %c0_3 = arith.constant 0 : index
    %2 = vector.load %arg3[%c0_2, %c0_3] : memref<32x32xf32, #tpu.memory_space<vmem>>, vector<32x32xf32>
    %cst = arith.constant dense<0.000000e+00> : vector<32x32xf32>
    %3 = tpu.matmul %1, %2, %cst {dimension_numbers = #tpu.dot_dimension_numbers<[1], [0], [0], [1], [0, 0, 1, 1], [], []>} : vector<32x32xf32>, vector<32x32xf32>, vector<32x32xf32> -> vector<32x32xf32>
    %4 = vector.shape_cast %3 : vector<32x32xf32> to vector<2x16x32xf32>
    %c0_4 = arith.constant 0 : index
    %c0_5 = arith.constant 0 : index
    %5 = vector.load %arg2[%c0_4, %c0_5] : memref<2x32xf32, #tpu.memory_space<vmem>>, vector<2x32xf32>
    %6 = vector.shape_cast %5 : vector<2x32xf32> to vector<2x1x32xf32>
    %7 = vector.broadcast %6 : vector<2x1x32xf32> to vector<2x16x32xf32>
    %8 = arith.addf %4, %7 : vector<2x16x32xf32>
    %cst_6 = arith.constant 0.000000e+00 : f32
    %9 = vector.broadcast %cst_6 : f32 to vector<2x16x32xf32>
    %10 = arith.maximumf %8, %9 : vector<2x16x32xf32>
    %c0_7 = arith.constant 0 : index
    %c0_8 = arith.constant 0 : index
    %11 = vector.load %arg4[%c0_7, %c0_8] : memref<1x32xf32, #tpu.memory_space<vmem>>, vector<1x32xf32>
    %12 = vector.shape_cast %11 : vector<1x32xf32> to vector<1x1x32xf32>
    %13 = vector.broadcast %12 : vector<1x1x32xf32> to vector<2x16x32xf32>
    %14 = arith.mulf %10, %13 : vector<2x16x32xf32>
    %cst_9 = arith.constant dense<0.000000e+00> : vector<2x16xf32>
    %15 = vector.multi_reduction <add>, %14, %cst_9 [2] : vector<2x16x32xf32> to vector<2x16xf32>
    %16 = tpu.iota {dimensions = array<i32: 1>} : vector<2x16xi32>
    %c14_i32 = arith.constant 14 : i32
    %17 = vector.broadcast %c14_i32 : i32 to vector<2x16xi32>
    %18 = arith.cmpi slt, %16, %17 : vector<2x16xi32>
    %cst_10 = arith.constant 0xFF800000 : f32
    %19 = vector.broadcast %cst_10 : f32 to vector<2x16xf32>
    %20 = arith.select %18, %15, %19 : vector<2x16xi1>, vector<2x16xf32>
    %cst_11 = arith.constant dense<0xFF800000> : vector<2xf32>
    %21 = vector.multi_reduction <maximumf>, %20, %cst_11 [1] : vector<2x16xf32> to vector<2xf32>
    %22 = vector.shape_cast %21 : vector<2xf32> to vector<2x1xf32>
    %23 = vector.broadcast %22 : vector<2x1xf32> to vector<2x16xf32>
    %24 = arith.subf %20, %23 : vector<2x16xf32>
    %25 = math.exp %24 : vector<2x16xf32>
    %cst_12 = arith.constant dense<0.000000e+00> : vector<2xf32>
    %26 = vector.multi_reduction <add>, %25, %cst_12 [1] : vector<2x16xf32> to vector<2xf32>
    %27 = vector.shape_cast %26 : vector<2xf32> to vector<2x1xf32>
    %28 = tpu.reciprocal %27 : vector<2x1xf32> -> vector<2x1xf32>
    %29 = vector.broadcast %28 : vector<2x1xf32> to vector<2x16xf32>
    %30 = arith.mulf %25, %29 : vector<2x16xf32>
    %31 = vector.shape_cast %30 : vector<2x16xf32> to vector<2x16x1xf32>
    %32 = vector.broadcast %31 : vector<2x16x1xf32> to vector<2x16x32xf32>
    %33 = arith.mulf %0, %32 : vector<2x16x32xf32>
    %cst_13 = arith.constant dense<0.000000e+00> : vector<2x32xf32>
    %34 = vector.multi_reduction <add>, %33, %cst_13 [1] : vector<2x16x32xf32> to vector<2x32xf32>
    %c0_14 = arith.constant 0 : index
    %c0_15 = arith.constant 0 : index
    %35 = vector.load %arg5[%c0_14, %c0_15] : memref<2x32xf32, #tpu.memory_space<vmem>>, vector<2x32xf32>
    tpu.vector_store %arg5[%c0_14, %c0_15], %34 {strides = array<i32>} : memref<2x32xf32, #tpu.memory_space<vmem>>, vector<2x32xf32>,
    %c0_16 = arith.constant 0 : index
    %c0_17 = arith.constant 0 : index
    %36 = vector.load %arg6[%c0_16, %c0_17] : memref<2x16xf32, #tpu.memory_space<vmem>>, vector<2x16xf32>
    tpu.vector_store %arg6[%c0_16, %c0_17], %30 {strides = array<i32>} : memref<2x16xf32, #tpu.memory_space<vmem>>, vector<2x16xf32>,
    return
  }
  func.func @transform_0(%arg0: i32) -> (i32, i32, i32) {
    %c0_i32 = arith.constant 0 : i32
    %c0_i32_0 = arith.constant 0 : i32
    %c0_i32_1 = arith.constant 0 : i32
    return %arg0, %c0_i32, %c0_i32_0 : i32, i32, i32
  }
  func.func @transform_1(%arg0: i32) -> (i32, i32) {
    %c0_i32 = arith.constant 0 : i32
    %c0_i32_0 = arith.constant 0 : i32
    return %arg0, %c0_i32 : i32, i32
  }
  func.func @transform_2(%arg0: i32) -> (i32, i32) {
    %c0_i32 = arith.constant 0 : i32
    %c0_i32_0 = arith.constant 0 : i32
    %c0_i32_1 = arith.constant 0 : i32
    return %c0_i32, %c0_i32_0 : i32, i32
  }
  func.func @transform_3(%arg0: i32) -> (i32, i32) {
    %c0_i32 = arith.constant 0 : i32
    %c0_i32_0 = arith.constant 0 : i32
    %c0_i32_1 = arith.constant 0 : i32
    return %c0_i32, %c0_i32_0 : i32, i32
  }
  func.func @transform_4(%arg0: i32) -> (i32, i32) {
    %c0_i32 = arith.constant 0 : i32
    %c0_i32_0 = arith.constant 0 : i32
    return %arg0, %c0_i32 : i32, i32
  }
  func.func @transform_5(%arg0: i32) -> (i32, i32) {
    %c0_i32 = arith.constant 0 : i32
    %c0_i32_0 = arith.constant 0 : i32
    return %arg0, %c0_i32 : i32, i32
  }
}

</mosaic_0001>

<llo_original>
// kernel: tpu_custom_call.1
$region0: #{tpu_custom_call.1}
  #allocation0 [shape = 'u32[]', space=smem, size = 0x4, offset = 0x4, fixed_abs, tag = 'smem constant byte address 0x4 - core index']
  #allocation1 [shape = 'u32[144,128]{1,0:T(1,128)}', space=vmem, size = 0x12000, scoped, tag = 'internal scratch']
  %s0 = inlined_call_operand.hbm [shape: f32[2,16,32], index: 0, kind: input, shape index: {}]
  %s1 = inlined_call_operand.vmem [shape: f32[2,32], index: 1, kind: input, shape index: {}]
  %s2 = inlined_call_operand.hbm [shape: f32[32,32], index: 2, kind: input, shape index: {}]
  %s3 = inlined_call_operand.vmem [shape: f32[1,32], index: 3, kind: input, shape index: {}]
  %s4 = inlined_call_operand.hbm [shape: f32[2,32], index: 4, kind: output, shape index: {0}]
  %s5 = inlined_call_operand.hbm [shape: f32[2,16], index: 5, kind: output, shape index: {1}]
  %6 = xla_tuple %s4, %s5
  %s7 = sld [smem:[#allocation0]]
  $region42: #{tpu_custom_call.1} parent=0
    _
  %s9 = ssub.s32 1, %s7
  %s10 = scalar_select 0, %s9, %s7
  $region1: #{tpu_custom_call.1} parent=0
    #allocation2 [shape = 'u8[16384]{0}', space=vmem, size = 0x4000, scoped, tag = 'input window, operand 0, single buffered']
    #allocation3 [shape = 's32[1]{0}', space=sflag, size = 0x4, scoped, tag = 'scoped memory for tpu_custom_call.1']
    #allocation4 [shape = 's32[1]{0}', space=sflag, size = 0x4, scoped, tag = 'scoped memory for tpu_custom_call.1']
    #allocation5 [shape = 'u8[16384]{0}', space=vmem, size = 0x4000, scoped, tag = 'input window, operand 2, single buffered']
    #allocation6 [shape = 's32[1]{0}', space=sflag, size = 0x4, scoped, tag = 'scoped memory for tpu_custom_call.1']
    #allocation7 [shape = 'u8[1024]{0}', space=vmem, size = 0x400, scoped, tag = 'output window, operand 0, single buffered']
    #allocation8 [shape = 'u8[1024]{0}', space=vmem, size = 0x400, scoped, tag = 'output window, operand 1, single buffered']
    #allocation9 [shape = 's32[1]{0}', space=sflag, size = 0x4, scoped, tag = 'scoped memory for tpu_custom_call.1']
    %11 = vsyncpa [#allocation3], 0
    %12 = vsyncpa [#allocation6], 0
    %13 = vsyncpa [#allocation4], 0
    %14 = vsyncpa [#allocation9], 0
    // Predicated region
    $region2: #{tpu_custom_call.1} parent=1 // pred_check
      _
    $region3: #{tpu_custom_call.1} parent=1 // pred_check_branch
      %16 = sbr.rel (0) target = $region5
    $region4: #{tpu_custom_call.1} parent=1 // pred_region
      %s18 = ssub.s32 512, 512
      %19 = vsyncadd [#allocation3], %s18
      %s20 = sshll.u32 [#allocation2], 4
      %s21 = int_to_ptr.vmem [resolvable:$true] %s20
      %26 = dma.hbm_to_vmem [thread:$0]  %s0, 512, %s21, [#allocation3], 128, 128, 8
    $region5: #{tpu_custom_call.1} parent=1 // pred_fallthru
      _
    // Predicated region
    $region6: #{tpu_custom_call.1} parent=1 // pred_check
      _
    $region7: #{tpu_custom_call.1} parent=1 // pred_check_branch
      %28 = sbr.rel (0) target = $region9
    $region8: #{tpu_custom_call.1} parent=1 // pred_region
      _
    $region9: #{tpu_custom_call.1} parent=1 // pred_fallthru
      _
    // Predicated region
    $region10: #{tpu_custom_call.1} parent=1 // pred_check
      _
    $region11: #{tpu_custom_call.1} parent=1 // pred_check_branch
      %30 = sbr.rel (0) target = $region13
    $region12: #{tpu_custom_call.1} parent=1 // pred_region
      %s32 = ssub.s32 512, 512
      %33 = vsyncadd [#allocation6], %s32
      %s34 = sshll.u32 [#allocation5], 4
      %s35 = int_to_ptr.vmem [resolvable:$true] %s34
      %40 = dma.hbm_to_vmem [thread:$0]  %s2, 512, %s35, [#allocation6], 128, 128, 8
    $region13: #{tpu_custom_call.1} parent=1 // pred_fallthru
      _
    // Predicated region
    $region14: #{tpu_custom_call.1} parent=1 // pred_check
      _
    $region15: #{tpu_custom_call.1} parent=1 // pred_check_branch
      %42 = sbr.rel (0) target = $region17
    $region16: #{tpu_custom_call.1} parent=1 // pred_region
      _
    $region17: #{tpu_custom_call.1} parent=1 // pred_fallthru
      _
    // Predicated region
    $region18: #{tpu_custom_call.1} parent=1 // pred_check
      _
    $region19: #{tpu_custom_call.1} parent=1 // pred_check_branch
      %44 = sbr.rel (0) target = $region21
    $region20: #{tpu_custom_call.1} parent=1 // pred_region
      %45 = dma.done [#allocation3], 512
    $region21: #{tpu_custom_call.1} parent=1 // pred_fallthru
      _
    // Predicated region
    $region22: #{tpu_custom_call.1} parent=1 // pred_check
      _
    $region23: #{tpu_custom_call.1} parent=1 // pred_check_branch
      %47 = sbr.rel (0) target = $region25
    $region24: #{tpu_custom_call.1} parent=1 // pred_region
      %48 = dma.done [#allocation6], 512
    $region25: #{tpu_custom_call.1} parent=1 // pred_fallthru
      _
    %v49 = vld [vmem:[#allocation2] sm:$0xff]
    %v50 = vld [vmem:[#allocation2 + $0x8] sm:$0xff]
    %v51 = vld [vmem:[#allocation2 + $0x10] sm:$0xff]
    %v52 = vld [vmem:[#allocation2 + $0x18] sm:$0xff]
    %v53 = vld [vmem:[#allocation5] sm:$0xff]
    %v54 = vld [vmem:[#allocation5 + $0x8] sm:$0xff]
    %v55 = vld [vmem:[#allocation5 + $0x10] sm:$0xff]
    %v56 = vld [vmem:[#allocation5 + $0x18] sm:$0xff]
    %vm57 = vcmask 261120
    %v59 = vsel %vm57, %v49, 0
    %v62 = vsel %vm57, %v50, 0
    %v65 = vsel %vm57, %v51, 0
    %v68 = vsel %vm57, %v52, 0
    %70 = vmatprep.subr.mxu0 0.0
    %71 = vmatpush1.msra.mxu0 %v53
    %72 = vmatprep.subr.mxu0 0.0
    %73 = vmatpush1.msra.mxu0 %v54
    %74 = vmatprep.subr.mxu0 0.0
    %75 = vmatpush1.msra.mxu0 %v55
    %76 = vmatprep.subr.mxu0 0.0
    %77 = vmatpush1.msra.mxu0 %v56
    %78 = vmatprep.subr.mxu0 0.0
    %79 = vmatpush1.msra.mxu0 0.0
    %80 = vmatprep.subr.mxu0 0.0
    %81 = vmatpush1.msra.mxu0 0.0
    %82 = vmatprep.subr.mxu0 0.0
    %83 = vmatpush1.msra.mxu0 0.0
    %84 = vmatprep.subr.mxu0 0.0
    %85 = vmatpush1.msra.mxu0 0.0
    %86 = vmatprep.subr.mxu0 0.0
    %87 = vmatpush1.msra.mxu0 0.0
    %88 = vmatprep.subr.mxu0 0.0
    %89 = vmatpush1.msra.mxu0 0.0
    %90 = vmatprep.subr.mxu0 0.0
    %91 = vmatpush1.msra.mxu0 0.0
    %92 = vmatprep.subr.mxu0 0.0
    %93 = vmatpush1.msra.mxu0 0.0
    %94 = vmatprep.subr.mxu0 0.0
    %95 = vmatpush1.msra.mxu0 0.0
    %96 = vmatprep.subr.mxu0 0.0
    %97 = vmatpush1.msra.mxu0 0.0
    %98 = vmatprep.subr.mxu0 0.0
    %99 = vmatpush1.msra.mxu0 0.0
    %100 = vmatprep.subr.mxu0 0.0
    %101 = vmatpush1.msra.mxu0 0.0
    %102 = vmatprep.subr.mxu0 0.0
    %103 = vmatpush1.msra.mxu0 0.0
    %104 = vmatprep.subr.mxu0 0.0
    %105 = vmatpush1.msra.mxu0 0.0
    %106 = vmatprep.subr.mxu0 0.0
    %107 = vmatpush1.msra.mxu0 0.0
    %108 = vmatprep.subr.mxu0 0.0
    %109 = vmatpush1.msra.mxu0 0.0
    %110 = vmatprep.subr.mxu0 0.0
    %111 = vmatpush1.msra.mxu0 0.0
    %112 = vmatprep.subr.mxu0 0.0
    %113 = vmatpush1.msra.mxu0 0.0
    %114 = vmatprep.subr.mxu0 0.0
    %115 = vmatpush1.msra.mxu0 0.0
    %116 = vmatprep.subr.mxu0 0.0
    %117 = vmatpush1.msra.mxu0 0.0
    %118 = vmatprep.subr.mxu0 0.0
    %119 = vmatpush1.msra.mxu0 0.0
    %120 = vmatprep.subr.mxu0 0.0
    %121 = vmatpush1.msra.mxu0 0.0
    %122 = vmatprep.subr.mxu0 0.0
    %123 = vmatpush1.msra.mxu0 0.0
    %124 = vmatprep.subr.mxu0 0.0
    %125 = vmatpush1.msra.mxu0 0.0
    %126 = vmatprep.subr.mxu0 0.0
    %127 = vmatpush1.msra.mxu0 0.0
    %128 = vmatprep.subr.mxu0 0.0
    %129 = vmatpush1.msra.mxu0 0.0
    %130 = vmatprep.subr.mxu0 0.0
    %131 = vmatpush1.msra.mxu0 0.0
    %132 = vmatprep.subr.mxu0 0.0
    %133 = vmatpush1.msra.mxu0 0.0
    %134 = vmatprep.mubr.f32.mxu0 0.0
    %135 = vmatmul.mubr.f32.gmra.mrb[0].mxu0 %v59
    %v136 = vpop.f32.mrb[0].mxu0
    %v137 = vadd.f32 0.0, %v136
    %v138 = vpop.f32.mrb[0].mxu0
    %139 = vmatprep.mubr.f32.mxu0 0.0
    %140 = vmatmul.mubr.f32.gmra.mrb[0].mxu0 %v62
    %v141 = vpop.f32.mrb[0].mxu0
    %v142 = vadd.f32 0.0, %v141
    %v143 = vpop.f32.mrb[0].mxu0
    %144 = vmatprep.mubr.f32.mxu0 0.0
    %145 = vmatmul.mubr.f32.gmra.mrb[0].mxu0 %v65
    %v146 = vpop.f32.mrb[0].mxu0
    %v147 = vadd.f32 0.0, %v146
    %v148 = vpop.f32.mrb[0].mxu0
    %149 = vmatprep.mubr.f32.mxu0 0.0
    %150 = vmatmul.mubr.f32.gmra.mrb[0].mxu0 %v68
    %v151 = vpop.f32.mrb[0].mxu0
    %v152 = vadd.f32 0.0, %v151
    %v153 = vpop.f32.mrb[0].mxu0
    %154 = vdwg.mxu0
    %v155 = vld [vmem:[%s1] sm:$0x3]
    %v158 = vunpack.c.l.s4 1966171168
    %v159 = vunpack.c.0.s8 %v158
    %v160 = vlaneseq
    %v161 = vshrl.u32 %v160, 7
    %v162 = vsub.s32 %v159, %v161
    %v163 = vrot.slane %v155, %v162
    %v164 = vcombine.high %v163, %v163
    %v166 = vunpack.c.l.s4 1966171168
    %v167 = vunpack.c.0.s8 %v166
    %v168 = vlaneseq
    %v169 = vshrl.u32 %v168, 7
    %v170 = vsub.s32 %v167, %v169
    %v171 = vrot.slane %v163, %v170
    %v173 = vunpack.c.l.s4 1966171168
    %v174 = vunpack.c.0.s8 %v173
    %v175 = vlaneseq
    %v176 = vshrl.u32 %v175, 7
    %v177 = vsub.s32 %v174, %v176
    %v178 = vrot.slane %v164, %v177
    %v179 = vlaneseq
    %v180 = vshrl.u32 %v179, 7
    %v181 = vsub.s32 0, %v180
    %v182 = vrot.slane %v171, %v181
    %v183 = vlaneseq
    %v184 = vshrl.u32 %v183, 7
    %v185 = vsub.s32 0, %v184
    %v186 = vrot.slane %v178, %v185
    %v189 = vadd.f32 %v137, %v182
    %v190 = vadd.f32 %v142, %v182
    %v191 = vadd.f32 %v147, %v186
    %v192 = vadd.f32 %v152, %v186
    %v193 = vmax.f32 %v189, 0.0
    %v194 = vmax.f32 %v190, 0.0
    %v195 = vmax.f32 %v191, 0.0
    %v196 = vmax.f32 %v192, 0.0
    %v197 = vld [vmem:[%s3] sm:$0x1]
    %v199 = vlaneseq
    %v200 = vshrl.u32 %v199, 7
    %v201 = vsub.s32 0, %v200
    %v202 = vrot.slane %v197, %v201
    %v204 = vmul.f32 %v193, %v202
    %v205 = vmul.f32 %v194, %v202
    %v206 = vmul.f32 %v195, %v202
    %v207 = vmul.f32 %v196, %v202
    %v208 = vsel %vm57, %v204, 0.0
    %209 = vadd.xlane.f32.xlu0 %v208
    %v210 = vpop.xlane.xlu0 %209
    %v211 = vsel %vm57, %v205, 0.0
    %212 = vadd.xlane.f32.xlu0 %v211
    %v213 = vpop.xlane.xlu0 %212
    %v214 = vsel %vm57, %v206, 0.0
    %215 = vadd.xlane.f32.xlu0 %v214
    %v216 = vpop.xlane.xlu0 %215
    %v217 = vsel %vm57, %v207, 0.0
    %218 = vadd.xlane.f32.xlu0 %v217
    %v219 = vpop.xlane.xlu0 %218
    %v220 = vlaneseq
    %v221 = vand.u32 %v220, 127
    %vm222 = vcmp.lt.s32.totalorder %v221, 14
    %v227 = vlaneseq
    %v228 = vshrl.u32 %v227, 7
    %v229 = vsub.s32 %v221, %v228
    %v230 = vrot.slane %v210, %v229
    %v231 = vadd.s32 %v221, 4294967288
    %v232 = vlaneseq
    %v233 = vshrl.u32 %v232, 7
    %v234 = vsub.s32 %v231, %v233
    %v235 = vrot.slane %v213, %v234
    %vm236 = vcmask 130112
    %v237 = vsel %vm236, %v235, %v230
    %v238 = vlaneseq
    %v239 = vshrl.u32 %v238, 7
    %v240 = vsub.s32 %v221, %v239
    %v241 = vrot.slane %v216, %v240
    %v242 = vlaneseq
    %v243 = vshrl.u32 %v242, 7
    %v244 = vsub.s32 %v231, %v243
    %v245 = vrot.slane %v219, %v244
    %v246 = vsel %vm236, %v245, %v241
    %vm247 = vcmask 1041409
    %v248 = vsel %vm247, %v246, %v237
    %v250 = vsel %vm222, %v248, -inf
    %vm251 = vcmask 123904
    %v252 = vsel %vm251, %v250, -inf
    %253 = vmax.xlane.f32.xlu0 %v252
    %v254 = vpop.xlane.xlu0 %253
    %v255 = vsub.f32 %v250, %v254
    %v256 = vmul.f32 %v255, 1.442695
    %v257 = vpow.pop %v256
    %v258 = vsel %vm251, %v257, 0.0
    %259 = vadd.xlane.f32.xlu0 %v258
    %v260 = vpop.xlane.xlu0 %259
    %v261 = vrcp.pop %v260
    %v262 = vmul.f32 %v257, %v261
    %v263 = vlaneseq
    %v264 = vshrl.u32 %v263, 7
    %v265 = vsub.s32 0, %v264
    %v266 = vrot.slane %v262, %v265
    %268 = vbcast.lane.b32.xlu0 %v266, 256
    %v269 = vpop.permute.xlu0 %268
    %s271 = sor.u32 256, 8
    %272 = vbcast.lane.b32.xlu0 %v266, %s271
    %v273 = vpop.permute.xlu0 %272
    %v274 = vlaneseq
    %v275 = vshrl.u32 %v274, 7
    %v276 = vsub.s32 1, %v275
    %v277 = vrot.slane %v262, %v276
    %279 = vbcast.lane.b32.xlu0 %v277, 256
    %v280 = vpop.permute.xlu0 %279
    %s282 = sor.u32 256, 8
    %283 = vbcast.lane.b32.xlu0 %v277, %s282
    %v284 = vpop.permute.xlu0 %283
    %v285 = vmul.f32 %v49, %v269
    %v286 = vmul.f32 %v50, %v273
    %v287 = vmul.f32 %v51, %v280
    %v288 = vmul.f32 %v52, %v284
    %v289 = vsel %vm57, %v285, 0.0
    %v290 = vsel %vm57, %v286, 0.0
    %v291 = vadd.f32 %v289, %v290
    %v292 = vrot.slane %v291, 4
    %v293 = vadd.f32 %v291, %v292
    %v294 = vrot.slane %v293, 2
    %v295 = vadd.f32 %v293, %v294
    %v296 = vrot.slane %v295, 1
    %v297 = vadd.f32 %v295, %v296
    %v298 = vsel %vm57, %v287, 0.0
    %v299 = vsel %vm57, %v288, 0.0
    %v300 = vadd.f32 %v298, %v299
    %v301 = vrot.slane %v300, 4
    %v302 = vadd.f32 %v300, %v301
    %v303 = vrot.slane %v302, 2
    %v304 = vadd.f32 %v302, %v303
    %v305 = vrot.slane %v304, 1
    %v306 = vadd.f32 %v304, %v305
    %v309 = vsel %vm247, %v306, %v297
    %vm311 = vcmask 254976
    %312 = vst.msk [vmem:[#allocation7] sm:$0x3] %vm311, %v309
    %313 = vst.msk [vmem:[#allocation8] sm:$0x3] %vm251, %v262
    // Predicated region
    $region26: #{tpu_custom_call.1} parent=1 // pred_check
      _
    $region27: #{tpu_custom_call.1} parent=1 // pred_check_branch
      %315 = sbr.rel (0) target = $region29
    $region28: #{tpu_custom_call.1} parent=1 // pred_region
      %s317 = ssub.s32 32, 32
      %318 = vsyncadd [#allocation4], %s317
      %s320 = sshll.u32 [#allocation7], 4
      %s321 = int_to_ptr.vmem [resolvable:$true] %s320
      %323 = dma.vmem_to_hbm [thread:$0]  %s321, 32, %s4, [#allocation4]
    $region29: #{tpu_custom_call.1} parent=1 // pred_fallthru
      _
    // Predicated region
    $region30: #{tpu_custom_call.1} parent=1 // pred_check
      _
    $region31: #{tpu_custom_call.1} parent=1 // pred_check_branch
      %325 = sbr.rel (0) target = $region33
    $region32: #{tpu_custom_call.1} parent=1 // pred_region
      %s327 = ssub.s32 32, 32
      %328 = vsyncadd [#allocation9], %s327
      %s330 = sshll.u32 [#allocation8], 4
      %s331 = int_to_ptr.vmem [resolvable:$true] %s330
      %333 = dma.vmem_to_hbm [thread:$0]  %s331, 32, %s5, [#allocation9]
    $region33: #{tpu_custom_call.1} parent=1 // pred_fallthru
      _
    // Predicated region
    $region34: #{tpu_custom_call.1} parent=1 // pred_check
      _
    $region35: #{tpu_custom_call.1} parent=1 // pred_check_branch
      %335 = sbr.rel (0) target = $region37
    $region36: #{tpu_custom_call.1} parent=1 // pred_region
      %336 = dma.done [#allocation4], 32
    $region37: #{tpu_custom_call.1} parent=1 // pred_fallthru
      _
    // Predicated region
    $region38: #{tpu_custom_call.1} parent=1 // pred_check
      _
    $region39: #{tpu_custom_call.1} parent=1 // pred_check_branch
      %338 = sbr.rel (0) target = $region41
    $region40: #{tpu_custom_call.1} parent=1 // pred_region
      %339 = dma.done [#allocation9], 32
    $region41: #{tpu_custom_call.1} parent=1 // pred_fallthru
      _
    %340 = vsyncpa [#allocation3], 1
    %341 = vsyncpa [#allocation6], 1
    %342 = vsyncpa [#allocation4], 1
    %343 = vsyncpa [#allocation9], 1

// kernel: tpu_custom_call.1
$region0: #{tpu_custom_call.1}
  #allocation0 [shape = 'u32[]', space=smem, size = 0x4, offset = 0x4, fixed_abs, tag = 'smem constant byte address 0x4 - core index']
  #allocation1 [shape = 'u32[144,128]{1,0:T(1,128)}', space=vmem, size = 0x12000, scoped, tag = 'internal scratch']
  %s0 = inlined_call_operand.hbm [shape: f32[2,16,32], index: 0, kind: input, shape index: {}]
  %s1 = inlined_call_operand.vmem [shape: f32[2,32], index: 1, kind: input, shape index: {}]
  %s2 = inlined_call_operand.hbm [shape: f32[32,32], index: 2, kind: input, shape index: {}]
  %s3 = inlined_call_operand.vmem [shape: f32[1,32], index: 3, kind: input, shape index: {}]
  %s4 = inlined_call_operand.hbm [shape: f32[2,32], index: 4, kind: output, shape index: {0}]
  %s5 = inlined_call_operand.hbm [shape: f32[2,16], index: 5, kind: output, shape index: {1}]
  %6 = xla_tuple %s4, %s5
  %s7 = sld [smem:[#allocation0]]
  $region42: #{tpu_custom_call.1} parent=0
    _
  %s9 = ssub.s32 1, %s7
  %s10 = scalar_select 0, %s9, %s7
  $region1: #{tpu_custom_call.1} parent=0
    #allocation2 [shape = 'u8[16384]{0}', space=vmem, size = 0x4000, scoped, tag = 'input window, operand 0, single buffered']
    #allocation3 [shape = 's32[1]{0}', space=sflag, size = 0x4, scoped, tag = 'scoped memory for tpu_custom_call.1']
    #allocation4 [shape = 's32[1]{0}', space=sflag, size = 0x4, scoped, tag = 'scoped memory for tpu_custom_call.1']
    #allocation5 [shape = 'u8[16384]{0}', space=vmem, size = 0x4000, scoped, tag = 'input window, operand 2, single buffered']
    #allocation6 [shape = 's32[1]{0}', space=sflag, size = 0x4, scoped, tag = 'scoped memory for tpu_custom_call.1']
    #allocation7 [shape = 'u8[1024]{0}', space=vmem, size = 0x400, scoped, tag = 'output window, operand 0, single buffered']
    #allocation8 [shape = 'u8[1024]{0}', space=vmem, size = 0x400, scoped, tag = 'output window, operand 1, single buffered']
    #allocation9 [shape = 's32[1]{0}', space=sflag, size = 0x4, scoped, tag = 'scoped memory for tpu_custom_call.1']
    %11 = vsyncpa [#allocation3], 0
    %12 = vsyncpa [#allocation6], 0
    %13 = vsyncpa [#allocation4], 0
    %14 = vsyncpa [#allocation9], 0
    // Predicated region
    $region2: #{tpu_custom_call.1} parent=1 // pred_check
      _
    $region3: #{tpu_custom_call.1} parent=1 // pred_check_branch
      %16 = sbr.rel (0) target = $region5
    $region4: #{tpu_custom_call.1} parent=1 // pred_region
      %s18 = ssub.s32 512, 512
      %19 = vsyncadd [#allocation3], %s18
      %s20 = sshll.u32 [#allocation2], 4
      %s21 = int_to_ptr.vmem [resolvable:$true] %s20
      %26 = dma.hbm_to_vmem [thread:$0]  %s0, 512, %s21, [#allocation3], 128, 128, 8
    $region5: #{tpu_custom_call.1} parent=1 // pred_fallthru
      _
    // Predicated region
    $region6: #{tpu_custom_call.1} parent=1 // pred_check
      _
    $region7: #{tpu_custom_call.1} parent=1 // pred_check_branch
      %28 = sbr.rel (0) target = $region9
    $region8: #{tpu_custom_call.1} parent=1 // pred_region
      _
    $region9: #{tpu_custom_call.1} parent=1 // pred_fallthru
      _
    // Predicated region
    $region10: #{tpu_custom_call.1} parent=1 // pred_check
      _
    $region11: #{tpu_custom_call.1} parent=1 // pred_check_branch
      %30 = sbr.rel (0) target = $region13
    $region12: #{tpu_custom_call.1} parent=1 // pred_region
      %s32 = ssub.s32 512, 512
      %33 = vsyncadd [#allocation6], %s32
      %s34 = sshll.u32 [#allocation5], 4
      %s35 = int_to_ptr.vmem [resolvable:$true] %s34
      %40 = dma.hbm_to_vmem [thread:$0]  %s2, 512, %s35, [#allocation6], 128, 128, 8
    $region13: #{tpu_custom_call.1} parent=1 // pred_fallthru
      _
    // Predicated region
    $region14: #{tpu_custom_call.1} parent=1 // pred_check
      _
    $region15: #{tpu_custom_call.1} parent=1 // pred_check_branch
      %42 = sbr.rel (0) target = $region17
    $region16: #{tpu_custom_call.1} parent=1 // pred_region
      _
    $region17: #{tpu_custom_call.1} parent=1 // pred_fallthru
      _
    // Predicated region
    $region18: #{tpu_custom_call.1} parent=1 // pred_check
      _
    $region19: #{tpu_custom_call.1} parent=1 // pred_check_branch
      %44 = sbr.rel (0) target = $region21
    $region20: #{tpu_custom_call.1} parent=1 // pred_region
      %45 = dma.done [#allocation3], 512
    $region21: #{tpu_custom_call.1} parent=1 // pred_fallthru
      _
    // Predicated region
    $region22: #{tpu_custom_call.1} parent=1 // pred_check
      _
    $region23: #{tpu_custom_call.1} parent=1 // pred_check_branch
      %47 = sbr.rel (0) target = $region25
    $region24: #{tpu_custom_call.1} parent=1 // pred_region
      %48 = dma.done [#allocation6], 512
    $region25: #{tpu_custom_call.1} parent=1 // pred_fallthru
      _
    %v49 = vld [vmem:[#allocation2] sm:$0xff]
    %v50 = vld [vmem:[#allocation2 + $0x8] sm:$0xff]
    %v51 = vld [vmem:[#allocation2 + $0x10] sm:$0xff]
    %v52 = vld [vmem:[#allocation2 + $0x18] sm:$0xff]
    %v53 = vld [vmem:[#allocation5] sm:$0xff]
    %v54 = vld [vmem:[#allocation5 + $0x8] sm:$0xff]
    %v55 = vld [vmem:[#allocation5 + $0x10] sm:$0xff]
    %v56 = vld [vmem:[#allocation5 + $0x18] sm:$0xff]
    %vm57 = vcmask 261120
    %v59 = vsel %vm57, %v49, 0
    %v62 = vsel %vm57, %v50, 0
    %v65 = vsel %vm57, %v51, 0
    %v68 = vsel %vm57, %v52, 0
    %70 = vmatprep.subr.mxu0 0.0
    %71 = vmatpush1.msra.mxu0 %v53
    %72 = vmatprep.subr.mxu0 0.0
    %73 = vmatpush1.msra.mxu0 %v54
    %74 = vmatprep.subr.mxu0 0.0
    %75 = vmatpush1.msra.mxu0 %v55
    %76 = vmatprep.subr.mxu0 0.0
    %77 = vmatpush1.msra.mxu0 %v56
    %78 = vmatprep.subr.mxu0 0.0
    %79 = vmatpush1.msra.mxu0 0.0
    %80 = vmatprep.subr.mxu0 0.0
    %81 = vmatpush1.msra.mxu0 0.0
    %82 = vmatprep.subr.mxu0 0.0
    %83 = vmatpush1.msra.mxu0 0.0
    %84 = vmatprep.subr.mxu0 0.0
    %85 = vmatpush1.msra.mxu0 0.0
    %86 = vmatprep.subr.mxu0 0.0
    %87 = vmatpush1.msra.mxu0 0.0
    %88 = vmatprep.subr.mxu0 0.0
    %89 = vmatpush1.msra.mxu0 0.0
    %90 = vmatprep.subr.mxu0 0.0
    %91 = vmatpush1.msra.mxu0 0.0
    %92 = vmatprep.subr.mxu0 0.0
    %93 = vmatpush1.msra.mxu0 0.0
    %94 = vmatprep.subr.mxu0 0.0
    %95 = vmatpush1.msra.mxu0 0.0
    %96 = vmatprep.subr.mxu0 0.0
    %97 = vmatpush1.msra.mxu0 0.0
    %98 = vmatprep.subr.mxu0 0.0
    %99 = vmatpush1.msra.mxu0 0.0
    %100 = vmatprep.subr.mxu0 0.0
    %101 = vmatpush1.msra.mxu0 0.0
    %102 = vmatprep.subr.mxu0 0.0
    %103 = vmatpush1.msra.mxu0 0.0
    %104 = vmatprep.subr.mxu0 0.0
    %105 = vmatpush1.msra.mxu0 0.0
    %106 = vmatprep.subr.mxu0 0.0
    %107 = vmatpush1.msra.mxu0 0.0
    %108 = vmatprep.subr.mxu0 0.0
    %109 = vmatpush1.msra.mxu0 0.0
    %110 = vmatprep.subr.mxu0 0.0
    %111 = vmatpush1.msra.mxu0 0.0
    %112 = vmatprep.subr.mxu0 0.0
    %113 = vmatpush1.msra.mxu0 0.0
    %114 = vmatprep.subr.mxu0 0.0
    %115 = vmatpush1.msra.mxu0 0.0
    %116 = vmatprep.subr.mxu0 0.0
    %117 = vmatpush1.msra.mxu0 0.0
    %118 = vmatprep.subr.mxu0 0.0
    %119 = vmatpush1.msra.mxu0 0.0
    %120 = vmatprep.subr.mxu0 0.0
    %121 = vmatpush1.msra.mxu0 0.0
    %122 = vmatprep.subr.mxu0 0.0
    %123 = vmatpush1.msra.mxu0 0.0
    %124 = vmatprep.subr.mxu0 0.0
    %125 = vmatpush1.msra.mxu0 0.0
    %126 = vmatprep.subr.mxu0 0.0
    %127 = vmatpush1.msra.mxu0 0.0
    %128 = vmatprep.subr.mxu0 0.0
    %129 = vmatpush1.msra.mxu0 0.0
    %130 = vmatprep.subr.mxu0 0.0
    %131 = vmatpush1.msra.mxu0 0.0
    %132 = vmatprep.subr.mxu0 0.0
    %133 = vmatpush1.msra.mxu0 0.0
    %134 = vmatprep.mubr.f32.mxu0 0.0
    %135 = vmatmul.mubr.f32.gmra.mrb[0].mxu0 %v59
    %v136 = vpop.f32.mrb[0].mxu0
    %v137 = vadd.f32 0.0, %v136
    %v138 = vpop.f32.mrb[0].mxu0
    %139 = vmatprep.mubr.f32.mxu0 0.0
    %140 = vmatmul.mubr.f32.gmra.mrb[0].mxu0 %v62
    %v141 = vpop.f32.mrb[0].mxu0
    %v142 = vadd.f32 0.0, %v141
    %v143 = vpop.f32.mrb[0].mxu0
    %144 = vmatprep.mubr.f32.mxu0 0.0
    %145 = vmatmul.mubr.f32.gmra.mrb[0].mxu0 %v65
    %v146 = vpop.f32.mrb[0].mxu0
    %v147 = vadd.f32 0.0, %v146
    %v148 = vpop.f32.mrb[0].mxu0
    %149 = vmatprep.mubr.f32.mxu0 0.0
    %150 = vmatmul.mubr.f32.gmra.mrb[0].mxu0 %v68
    %v151 = vpop.f32.mrb[0].mxu0
    %v152 = vadd.f32 0.0, %v151
    %v153 = vpop.f32.mrb[0].mxu0
    %154 = vdwg.mxu0
    %v155 = vld [vmem:[%s1] sm:$0x3]
    %v158 = vunpack.c.l.s4 1966171168
    %v159 = vunpack.c.0.s8 %v158
    %v160 = vlaneseq
    %v161 = vshrl.u32 %v160, 7
    %v162 = vsub.s32 %v159, %v161
    %v163 = vrot.slane %v155, %v162
    %v164 = vcombine.high %v163, %v163
    %v166 = vunpack.c.l.s4 1966171168
    %v167 = vunpack.c.0.s8 %v166
    %v168 = vlaneseq
    %v169 = vshrl.u32 %v168, 7
    %v170 = vsub.s32 %v167, %v169
    %v171 = vrot.slane %v163, %v170
    %v173 = vunpack.c.l.s4 1966171168
    %v174 = vunpack.c.0.s8 %v173
    %v175 = vlaneseq
    %v176 = vshrl.u32 %v175, 7
    %v177 = vsub.s32 %v174, %v176
    %v178 = vrot.slane %v164, %v177
    %v179 = vlaneseq
    %v180 = vshrl.u32 %v179, 7
    %v181 = vsub.s32 0, %v180
    %v182 = vrot.slane %v171, %v181
    %v183 = vlaneseq
    %v184 = vshrl.u32 %v183, 7
    %v185 = vsub.s32 0, %v184
    %v186 = vrot.slane %v178, %v185
    %v189 = vadd.f32 %v137, %v182
    %v190 = vadd.f32 %v142, %v182
    %v191 = vadd.f32 %v147, %v186
    %v192 = vadd.f32 %v152, %v186
    %v193 = vmax.f32 %v189, 0.0
    %v194 = vmax.f32 %v190, 0.0
    %v195 = vmax.f32 %v191, 0.0
    %v196 = vmax.f32 %v192, 0.0
    %v197 = vld [vmem:[%s3] sm:$0x1]
    %v199 = vlaneseq
    %v200 = vshrl.u32 %v199, 7
    %v201 = vsub.s32 0, %v200
    %v202 = vrot.slane %v197, %v201
    %v204 = vmul.f32 %v193, %v202
    %v205 = vmul.f32 %v194, %v202
    %v206 = vmul.f32 %v195, %v202
    %v207 = vmul.f32 %v196, %v202
    %v208 = vsel %vm57, %v204, 0.0
    %209 = vadd.xlane.f32.xlu0 %v208
    %v210 = vpop.xlane.xlu0 %209
    %v211 = vsel %vm57, %v205, 0.0
    %212 = vadd.xlane.f32.xlu0 %v211
    %v213 = vpop.xlane.xlu0 %212
    %v214 = vsel %vm57, %v206, 0.0
    %215 = vadd.xlane.f32.xlu0 %v214
    %v216 = vpop.xlane.xlu0 %215
    %v217 = vsel %vm57, %v207, 0.0
    %218 = vadd.xlane.f32.xlu0 %v217
    %v219 = vpop.xlane.xlu0 %218
    %v220 = vlaneseq
    %v221 = vand.u32 %v220, 127
    %vm222 = vcmp.lt.s32.totalorder %v221, 14
    %v227 = vlaneseq
    %v228 = vshrl.u32 %v227, 7
    %v229 = vsub.s32 %v221, %v228
    %v230 = vrot.slane %v210, %v229
    %v231 = vadd.s32 %v221, 4294967288
    %v232 = vlaneseq
    %v233 = vshrl.u32 %v232, 7
    %v234 = vsub.s32 %v231, %v233
    %v235 = vrot.slane %v213, %v234
    %vm236 = vcmask 130112
    %v237 = vsel %vm236, %v235, %v230
    %v238 = vlaneseq
    %v239 = vshrl.u32 %v238, 7
    %v240 = vsub.s32 %v221, %v239
    %v241 = vrot.slane %v216, %v240
    %v242 = vlaneseq
    %v243 = vshrl.u32 %v242, 7
    %v244 = vsub.s32 %v231, %v243
    %v245 = vrot.slane %v219, %v244
    %v246 = vsel %vm236, %v245, %v241
    %vm247 = vcmask 1041409
    %v248 = vsel %vm247, %v246, %v237
    %v250 = vsel %vm222, %v248, -inf
    %vm251 = vcmask 123904
    %v252 = vsel %vm251, %v250, -inf
    %253 = vmax.xlane.f32.xlu0 %v252
    %v254 = vpop.xlane.xlu0 %253
    %v255 = vsub.f32 %v250, %v254
    %v256 = vmul.f32 %v255, 1.442695
    %v257 = vpow.pop %v256
    %v258 = vsel %vm251, %v257, 0.0
    %259 = vadd.xlane.f32.xlu0 %v258
    %v260 = vpop.xlane.xlu0 %259
    %v261 = vrcp.pop %v260
    %v262 = vmul.f32 %v257, %v261
    %v263 = vlaneseq
    %v264 = vshrl.u32 %v263, 7
    %v265 = vsub.s32 0, %v264
    %v266 = vrot.slane %v262, %v265
    %268 = vbcast.lane.b32.xlu0 %v266, 256
    %v269 = vpop.permute.xlu0 %268
    %s271 = sor.u32 256, 8
    %272 = vbcast.lane.b32.xlu0 %v266, %s271
    %v273 = vpop.permute.xlu0 %272
    %v274 = vlaneseq
    %v275 = vshrl.u32 %v274, 7
    %v276 = vsub.s32 1, %v275
    %v277 = vrot.slane %v262, %v276
    %279 = vbcast.lane.b32.xlu0 %v277, 256
    %v280 = vpop.permute.xlu0 %279
    %s282 = sor.u32 256, 8
    %283 = vbcast.lane.b32.xlu0 %v277, %s282
    %v284 = vpop.permute.xlu0 %283
    %v285 = vmul.f32 %v49, %v269
    %v286 = vmul.f32 %v50, %v273
    %v287 = vmul.f32 %v51, %v280
    %v288 = vmul.f32 %v52, %v284
    %v289 = vsel %vm57, %v285, 0.0
    %v290 = vsel %vm57, %v286, 0.0
    %v291 = vadd.f32 %v289, %v290
    %v292 = vrot.slane %v291, 4
    %v293 = vadd.f32 %v291, %v292
    %v294 = vrot.slane %v293, 2
    %v295 = vadd.f32 %v293, %v294
    %v296 = vrot.slane %v295, 1
    %v297 = vadd.f32 %v295, %v296
    %v298 = vsel %vm57, %v287, 0.0
    %v299 = vsel %vm57, %v288, 0.0
    %v300 = vadd.f32 %v298, %v299
    %v301 = vrot.slane %v300, 4
    %v302 = vadd.f32 %v300, %v301
    %v303 = vrot.slane %v302, 2
    %v304 = vadd.f32 %v302, %v303
    %v305 = vrot.slane %v304, 1
    %v306 = vadd.f32 %v304, %v305
    %v309 = vsel %vm247, %v306, %v297
    %vm311 = vcmask 254976
    %312 = vst.msk [vmem:[#allocation7] sm:$0x3] %vm311, %v309
    %313 = vst.msk [vmem:[#allocation8] sm:$0x3] %vm251, %v262
    // Predicated region
    $region26: #{tpu_custom_call.1} parent=1 // pred_check
      _
    $region27: #{tpu_custom_call.1} parent=1 // pred_check_branch
      %315 = sbr.rel (0) target = $region29
    $region28: #{tpu_custom_call.1} parent=1 // pred_region
      %s317 = ssub.s32 32, 32
      %318 = vsyncadd [#allocation4], %s317
      %s320 = sshll.u32 [#allocation7], 4
      %s321 = int_to_ptr.vmem [resolvable:$true] %s320
      %323 = dma.vmem_to_hbm [thread:$0]  %s321, 32, %s4, [#allocation4]
    $region29: #{tpu_custom_call.1} parent=1 // pred_fallthru
      _
    // Predicated region
    $region30: #{tpu_custom_call.1} parent=1 // pred_check
      _
    $region31: #{tpu_custom_call.1} parent=1 // pred_check_branch
      %325 = sbr.rel (0) target = $region33
    $region32: #{tpu_custom_call.1} parent=1 // pred_region
      %s327 = ssub.s32 32, 32
      %328 = vsyncadd [#allocation9], %s327
      %s330 = sshll.u32 [#allocation8], 4
      %s331 = int_to_ptr.vmem [resolvable:$true] %s330
      %333 = dma.vmem_to_hbm [thread:$0]  %s331, 32, %s5, [#allocation9]
    $region33: #{tpu_custom_call.1} parent=1 // pred_fallthru
      _
    // Predicated region
    $region34: #{tpu_custom_call.1} parent=1 // pred_check
      _
    $region35: #{tpu_custom_call.1} parent=1 // pred_check_branch
      %335 = sbr.rel (0) target = $region37
    $region36: #{tpu_custom_call.1} parent=1 // pred_region
      %336 = dma.done [#allocation4], 32
    $region37: #{tpu_custom_call.1} parent=1 // pred_fallthru
      _
    // Predicated region
    $region38: #{tpu_custom_call.1} parent=1 // pred_check
      _
    $region39: #{tpu_custom_call.1} parent=1 // pred_check_branch
      %338 = sbr.rel (0) target = $region41
    $region40: #{tpu_custom_call.1} parent=1 // pred_region
      %339 = dma.done [#allocation9], 32
    $region41: #{tpu_custom_call.1} parent=1 // pred_fallthru
      _
    %340 = vsyncpa [#allocation3], 1
    %341 = vsyncpa [#allocation6], 1
    %342 = vsyncpa [#allocation4], 1
    %343 = vsyncpa [#allocation9], 1

</llo_original>
